<compile_context>
chip_gen: v5e
topology: v5e:2x2
jax: 0.10.0
libtpu: 0.0.40
codegen_flags: <defaults>
</compile_context>

<pallas_src>
import functools

import jax
import jax.numpy as jnp
from jax.experimental import pallas as pl
from jax.experimental.pallas import tpu as pltpu


def _round_up(n, m):
    return ((n + m - 1) // m) * m


def _mlp_kernel(x_ref, w1_ref, b1_ref, w2_ref, b2_ref, w3t_ref, b3_ref, o_ref):
    # x_ref  : (TB, D)  natural-layout x tile (streamed, double-buffered)
    # w1_ref : (H1, D)  b1_ref : (H1, 1)
    # w2_ref : (H2, H1) b2_ref : (H2, 1)
    # w3t_ref: (H2, 1)  b3_ref : (1, 1)
    # o_ref  : (1, TB)  lane-dense output row (batch on lanes)
    x = x_ref[...]

    # h1^T = W1 @ x^T : contract the feature axis of BOTH operands so the
    # batch lands on the 128-lane axis of every intermediate.
    h1 = jax.lax.dot_general(
        w1_ref[...], x,
        dimension_numbers=(((1,), (1,)), ((), ())),
        preferred_element_type=jnp.float32,
    ) + b1_ref[...]
    h1 = jnp.maximum(h1, 0.0)                                   # (H1, TB)

    h2 = jnp.dot(w2_ref[...], h1,
                 preferred_element_type=jnp.float32) + b2_ref[...]
    h2 = jnp.maximum(h2, 0.0)                                   # (H2, TB)

    # fc3 (10 -> 1): cheap VPU multiply + sublane reduction, bias folded in.
    y = jnp.sum(w3t_ref[...] * h2, axis=0, keepdims=True) + b3_ref[...]
    o_ref[...] = y.astype(o_ref.dtype)                          # (1, TB)


@functools.partial(jax.jit, static_argnames=("max_tile_b",))
def net_forward(x, params, *, max_tile_b=32768):
    """3-layer MLP forward as a single batch-gridded Pallas TPU kernel.

    x: (B, input_size) float32 (natural PyTorch layout, consumed as-is)
    params: PyTorch-layout weights: w1 (10, D), b1 (10,), w2 (10, 10),
            b2 (10,), w3 (1, 10), b3 (1,)
    returns: (B, 1) float32
    """
    f32 = jnp.float32
    B, D = x.shape
    H1 = params["w1"].shape[0]
    H2 = params["w2"].shape[0]

    x = x.astype(f32)
    w1 = params["w1"].astype(f32)                       # (H1, D)
    b1 = params["b1"].astype(f32).reshape(H1, 1)
    w2 = params["w2"].astype(f32)                       # (H2, H1)
    b2 = params["b2"].astype(f32).reshape(H2, 1)
    w3t = params["w3"].astype(f32).reshape(1, H2).T     # (H2, 1)
    b3 = params["b3"].astype(f32).reshape(1, 1)

    # ---- batch tile selection -------------------------------------------
    # In VMEM the x tile lane-pads D up to a multiple of 128; keep the
    # double-buffered x stream under ~20 MiB so the whole kernel stays well
    # inside v7x's 64 MiB VMEM (larger is fine on v5e/v6e but not needed).
    lane_pad_d = _round_up(D, 128)
    vmem_cap = max(128, ((20 * 1024 * 1024) // (2 * lane_pad_d * 4)) // 128 * 128)
    # Give v7x's two TensorCores at least one tile each for mid-size batches
    # (dimension_semantics=("parallel",) shards the grid across cores).
    core_cap = _round_up(pl.cdiv(B, 2), 128) if B > 128 else 128
    tile_b = max(128, min(max_tile_b, vmem_cap, core_cap))
    if B <= tile_b:
        tile_b = B          # single exact tile: always a legal block shape
    grid = (pl.cdiv(B, tile_b),)

    const = lambda i: (0, 0)   # weights/biases: same block every step -> VMEM-resident

    out = pl.pallas_call(
        _mlp_kernel,
        out_shape=jax.ShapeDtypeStruct((1, B), f32),
        grid=grid,
        in_specs=[
            pl.BlockSpec((tile_b, D), lambda i: (i, 0)),   # streamed natural-layout x
            pl.BlockSpec((H1, D), const),
            pl.BlockSpec((H1, 1), const),
            pl.BlockSpec((H2, H1), const),
            pl.BlockSpec((H2, 1), const),
            pl.BlockSpec((H2, 1), const),
            pl.BlockSpec((1, 1), const),
        ],
        out_specs=pl.BlockSpec((1, tile_b), lambda i: (0, i)),  # lane-dense output
        compiler_params=pltpu.CompilerParams(
            dimension_semantics=("parallel",),   # shard batch over v7x's 2 TCs
            vmem_limit_bytes=48 * 1024 * 1024,
        ),
    )(x, w1, b1, w2, b2, w3t, b3)

    # (1, B) -> (B, 1): same flat order, free reshape (no transpose/HBM pass).
    return out.reshape(B, 1)


def init_params(key, input_size):
    """PyTorch-style Linear init (uniform +-1/sqrt(fan_in)), PyTorch layout:
    weight (out_features, in_features), bias (out_features,)."""
    def linear(k, fan_in, fan_out):
        kw, kb = jax.random.split(k)
        bound = 1.0 / jnp.sqrt(float(fan_in))
        w = jax.random.uniform(kw, (fan_out, fan_in), jnp.float32, -bound, bound)
        b = jax.random.uniform(kb, (fan_out,), jnp.float32, -bound, bound)
        return w, b

    k1, k2, k3 = jax.random.split(key, 3)
    w1, b1 = linear(k1, input_size, 10)
    w2, b2 = linear(k2, 10, 10)
    w3, b3 = linear(k3, 10, 1)
    return {"w1": w1, "b1": b1, "w2": w2, "b2": b2, "w3": w3, "b3": b3}


def _reference_forward(x, p):
    hi = jax.lax.Precision.HIGHEST
    h1 = jnp.maximum(jnp.dot(x, p["w1"].T, precision=hi) + p["b1"], 0.0)
    h2 = jnp.maximum(jnp.dot(h1, p["w2"].T, precision=hi) + p["b2"], 0.0)
    return jnp.dot(h2, p["w3"].T, precision=hi) + p["b3"]


if __name__ == "__main__":
    key = jax.random.PRNGKey(0)
    k_param, k_x1, k_x2 = jax.random.split(key, 3)

    input_size = 20  # e.g. window_size from the course notebook
    params = init_params(k_param, input_size)

    # Small-batch case (single exact tile).
    batch = 8
    x = jax.random.normal(k_x1, (batch, input_size), dtype=jnp.float32)
    out = jax.block_until_ready(net_forward(x, params))
    ref = _reference_forward(x, params)
    assert out.shape == (batch, 1)
    assert jnp.allclose(out, ref, atol=1e-4, rtol=1e-4), float(
        jnp.max(jnp.abs(out - ref)))

    # Multi-tile case with a ragged trailing block (exercises the grid path).
    batch2 = 300
    x2 = jax.random.normal(k_x2, (batch2, input_size), dtype=jnp.float32)
    out2 = jax.block_until_ready(net_forward(x2, params))
    ref2 = _reference_forward(x2, params)
    assert out2.shape == (batch2, 1)
    assert jnp.allclose(out2, ref2, atol=1e-4, rtol=1e-4), float(
        jnp.max(jnp.abs(out2 - ref2)))

    print("KERNEL_OK")
</pallas_src>

<mosaic_0001>
module attributes {stable_mosaic.version = 11 : i64} {
  func.func @_mlp_kernel(%arg0: i32, %arg1: memref<8x20xf32, #tpu.memory_space<vmem>>, %arg2: memref<10x20xf32, #tpu.memory_space<vmem>>, %arg3: memref<10x1xf32, #tpu.memory_space<vmem>>, %arg4: memref<10x10xf32, #tpu.memory_space<vmem>>, %arg5: memref<10x1xf32, #tpu.memory_space<vmem>>, %arg6: memref<10x1xf32, #tpu.memory_space<vmem>>, %arg7: memref<1x1xf32, #tpu.memory_space<vmem>>, %arg8: memref<1x8xf32, #tpu.memory_space<vmem>>) attributes {dimension_semantics = [#tpu.dimension_semantics<parallel>], iteration_bounds = array<i64: 1>, scalar_prefetch = 0 : i64, scratch_operands = 0 : i64, tpu.core_type = #tpu.core_type<tc>, window_params = [{transform_indices = @transform_0, window_bounds = array<i64: 8, 20>}, {pipeline_mode = #tpu.pipeline_mode<synchronous>, transform_indices = @transform_1, window_bounds = array<i64: 10, 20>}, {pipeline_mode = #tpu.pipeline_mode<synchronous>, transform_indices = @transform_2, window_bounds = array<i64: 10, 1>}, {pipeline_mode = #tpu.pipeline_mode<synchronous>, transform_indices = @transform_3, window_bounds = array<i64: 10, 10>}, {pipeline_mode = #tpu.pipeline_mode<synchronous>, transform_indices = @transform_4, window_bounds = array<i64: 10, 1>}, {pipeline_mode = #tpu.pipeline_mode<synchronous>, transform_indices = @transform_5, window_bounds = array<i64: 10, 1>}, {pipeline_mode = #tpu.pipeline_mode<synchronous>, transform_indices = @transform_6, window_bounds = array<i64: 1, 1>}, {transform_indices = @transform_7, window_bounds = array<i64: 1, 8>}]} {
    %c0 = arith.constant 0 : index
    %c0_0 = arith.constant 0 : index
    %0 = vector.load %arg1[%c0, %c0_0] : memref<8x20xf32, #tpu.memory_space<vmem>>, vector<8x20xf32>
    %c0_1 = arith.constant 0 : index
    %c0_2 = arith.constant 0 : index
    %1 = vector.load %arg2[%c0_1, %c0_2] : memref<10x20xf32, #tpu.memory_space<vmem>>, vector<10x20xf32>
    %cst = arith.constant dense<0.000000e+00> : vector<10x8xf32>
    %2 = tpu.matmul %1, %0, %cst {dimension_numbers = #tpu.dot_dimension_numbers<[1], [1], [0], [0], [0, 0, 1, 0], [], []>} : vector<10x20xf32>, vector<8x20xf32>, vector<10x8xf32> -> vector<10x8xf32>
    %c0_3 = arith.constant 0 : index
    %c0_4 = arith.constant 0 : index
    %3 = vector.load %arg3[%c0_3, %c0_4] : memref<10x1xf32, #tpu.memory_space<vmem>>, vector<10x1xf32>
    %4 = vector.broadcast %3 : vector<10x1xf32> to vector<10x8xf32>
    %5 = arith.addf %2, %4 : vector<10x8xf32>
    %cst_5 = arith.constant 0.000000e+00 : f32
    %6 = vector.broadcast %cst_5 : f32 to vector<10x8xf32>
    %7 = arith.maximumf %5, %6 : vector<10x8xf32>
    %c0_6 = arith.constant 0 : index
    %c0_7 = arith.constant 0 : index
    %8 = vector.load %arg4[%c0_6, %c0_7] : memref<10x10xf32, #tpu.memory_space<vmem>>, vector<10x10xf32>
    %cst_8 = arith.constant dense<0.000000e+00> : vector<10x8xf32>
    %9 = tpu.matmul %8, %7, %cst_8 {dimension_numbers = #tpu.dot_dimension_numbers<[1], [0], [0], [1], [0, 0, 1, 1], [], []>} : vector<10x10xf32>, vector<10x8xf32>, vector<10x8xf32> -> vector<10x8xf32>
    %c0_9 = arith.constant 0 : index
    %c0_10 = arith.constant 0 : index
    %10 = vector.load %arg5[%c0_9, %c0_10] : memref<10x1xf32, #tpu.memory_space<vmem>>, vector<10x1xf32>
    %11 = vector.broadcast %10 : vector<10x1xf32> to vector<10x8xf32>
    %12 = arith.addf %9, %11 : vector<10x8xf32>
    %cst_11 = arith.constant 0.000000e+00 : f32
    %13 = vector.broadcast %cst_11 : f32 to vector<10x8xf32>
    %14 = arith.maximumf %12, %13 : vector<10x8xf32>
    %c0_12 = arith.constant 0 : index
    %c0_13 = arith.constant 0 : index
    %15 = vector.load %arg6[%c0_12, %c0_13] : memref<10x1xf32, #tpu.memory_space<vmem>>, vector<10x1xf32>
    %16 = vector.broadcast %15 : vector<10x1xf32> to vector<10x8xf32>
    %17 = arith.mulf %16, %14 : vector<10x8xf32>
    %cst_14 = arith.constant dense<0.000000e+00> : vector<8xf32>
    %18 = vector.multi_reduction <add>, %17, %cst_14 [0] : vector<10x8xf32> to vector<8xf32>
    %19 = vector.shape_cast %18 : vector<8xf32> to vector<1x8xf32>
    %c0_15 = arith.constant 0 : index
    %c0_16 = arith.constant 0 : index
    %20 = vector.load %arg7[%c0_15, %c0_16] : memref<1x1xf32, #tpu.memory_space<vmem>>, vector<1x1xf32>
    %21 = vector.broadcast %20 : vector<1x1xf32> to vector<1x8xf32>
    %22 = arith.addf %19, %21 : vector<1x8xf32>
    %c0_17 = arith.constant 0 : index
    %c0_18 = arith.constant 0 : index
    %23 = vector.load %arg8[%c0_17, %c0_18] : memref<1x8xf32, #tpu.memory_space<vmem>>, vector<1x8xf32>
    tpu.vector_store %arg8[%c0_17, %c0_18], %22 {strides = array<i32>} : memref<1x8xf32, #tpu.memory_space<vmem>>, vector<1x8xf32>,
    return
  }
  func.func @transform_0(%arg0: i32) -> (i32, i32) {
    %c0_i32 = arith.constant 0 : i32
    %c0_i32_0 = arith.constant 0 : i32
    return %arg0, %c0_i32 : i32, i32
  }
  func.func @transform_1(%arg0: i32) -> (i32, i32) {
    %c0_i32 = arith.constant 0 : i32
    %c0_i32_0 = arith.constant 0 : i32
    %c0_i32_1 = arith.constant 0 : i32
    return %c0_i32, %c0_i32_0 : i32, i32
  }
  func.func @transform_2(%arg0: i32) -> (i32, i32) {
    %c0_i32 = arith.constant 0 : i32
    %c0_i32_0 = arith.constant 0 : i32
    %c0_i32_1 = arith.constant 0 : i32
    return %c0_i32, %c0_i32_0 : i32, i32
  }
  func.func @transform_3(%arg0: i32) -> (i32, i32) {
    %c0_i32 = arith.constant 0 : i32
    %c0_i32_0 = arith.constant 0 : i32
    %c0_i32_1 = arith.constant 0 : i32
    return %c0_i32, %c0_i32_0 : i32, i32
  }
  func.func @transform_4(%arg0: i32) -> (i32, i32) {
    %c0_i32 = arith.constant 0 : i32
    %c0_i32_0 = arith.constant 0 : i32
    %c0_i32_1 = arith.constant 0 : i32
    return %c0_i32, %c0_i32_0 : i32, i32
  }
  func.func @transform_5(%arg0: i32) -> (i32, i32) {
    %c0_i32 = arith.constant 0 : i32
    %c0_i32_0 = arith.constant 0 : i32
    %c0_i32_1 = arith.constant 0 : i32
    return %c0_i32, %c0_i32_0 : i32, i32
  }
  func.func @transform_6(%arg0: i32) -> (i32, i32) {
    %c0_i32 = arith.constant 0 : i32
    %c0_i32_0 = arith.constant 0 : i32
    %c0_i32_1 = arith.constant 0 : i32
    return %c0_i32, %c0_i32_0 : i32, i32
  }
  func.func @transform_7(%arg0: i32) -> (i32, i32) {
    %c0_i32 = arith.constant 0 : i32
    %c0_i32_0 = arith.constant 0 : i32
    return %c0_i32, %arg0 : i32, i32
  }
}

</mosaic_0001>

<llo_original>
// kernel: net_forward.1
$region0: #{net_forward.1}
  #allocation0 [shape = 'u32[]', space=smem, size = 0x4, offset = 0x4, fixed_abs, tag = 'smem constant byte address 0x4 - core index']
  #allocation1 [shape = 'u32[72,128]{1,0:T(1,128)}', space=vmem, size = 0x9000, scoped, tag = 'internal scratch']
  #allocation2 [shape = 'f32[1,1]{1,0:T(1,128)S(1)}', space=vmem, size = 0x200, scoped, tag = 'scoped memory for net_forward.1']
  %s0 = inlined_call_operand.vmem [shape: f32[8,20], index: 0, kind: input, shape index: {}]
  %s1 = inlined_call_operand.vmem [shape: f32[10,20], index: 1, kind: input, shape index: {}]
  %s2 = inlined_call_operand.vmem [shape: f32[10,1], index: 2, kind: input, shape index: {}]
  %s3 = inlined_call_operand.vmem [shape: f32[10,10], index: 3, kind: input, shape index: {}]
  %s4 = inlined_call_operand.vmem [shape: f32[10,1], index: 4, kind: input, shape index: {}]
  %s5 = inlined_call_operand.vmem [shape: f32[10,1], index: 5, kind: input, shape index: {}]
  %s6 = inlined_call_operand.<no memory space> [shape: f32[1,1], index: 6, kind: input, shape index: {}]
  %s7 = inlined_call_operand.hbm [shape: f32[1,8], index: 7, kind: output, shape index: {}]
  %s8 = sld [smem:[#allocation0]]
  $region38: #{net_forward.1} parent=0
    _
  %s10 = ssub.s32 1, %s8
  %s11 = scalar_select 0, %s10, %s8
  %v12 = vstv %s6
  %13 = vst [vmem:[#allocation2] sm:$0x1] %v12
  $region1: #{net_forward.1} parent=0
    #allocation3 [shape = 'u8[512]{0}', space=vmem, size = 0x400, scoped, tag = 'output window, operand 0, single buffered']
    #allocation4 [shape = 's32[1]{0}', space=sflag, size = 0x4, scoped, tag = 'scoped memory for net_forward.1']
    %14 = vsyncpa [#allocation4], 0
    // Predicated region
    $region2: #{net_forward.1} parent=1 // pred_check
      _
    $region3: #{net_forward.1} parent=1 // pred_check_branch
      %16 = sbr.rel (0) target = $region5
    $region4: #{net_forward.1} parent=1 // pred_region
      _
    $region5: #{net_forward.1} parent=1 // pred_fallthru
      _
    // Predicated region
    $region6: #{net_forward.1} parent=1 // pred_check
      _
    $region7: #{net_forward.1} parent=1 // pred_check_branch
      %18 = sbr.rel (0) target = $region9
    $region8: #{net_forward.1} parent=1 // pred_region
      _
    $region9: #{net_forward.1} parent=1 // pred_fallthru
      _
    // Predicated region
    $region10: #{net_forward.1} parent=1 // pred_check
      _
    $region11: #{net_forward.1} parent=1 // pred_check_branch
      %20 = sbr.rel (0) target = $region13
    $region12: #{net_forward.1} parent=1 // pred_region
      _
    $region13: #{net_forward.1} parent=1 // pred_fallthru
      _
    // Predicated region
    $region14: #{net_forward.1} parent=1 // pred_check
      _
    $region15: #{net_forward.1} parent=1 // pred_check_branch
      %22 = sbr.rel (0) target = $region17
    $region16: #{net_forward.1} parent=1 // pred_region
      _
    $region17: #{net_forward.1} parent=1 // pred_fallthru
      _
    // Predicated region
    $region18: #{net_forward.1} parent=1 // pred_check
      _
    $region19: #{net_forward.1} parent=1 // pred_check_branch
      %24 = sbr.rel (0) target = $region21
    $region20: #{net_forward.1} parent=1 // pred_region
      _
    $region21: #{net_forward.1} parent=1 // pred_fallthru
      _
    // Predicated region
    $region22: #{net_forward.1} parent=1 // pred_check
      _
    $region23: #{net_forward.1} parent=1 // pred_check_branch
      %26 = sbr.rel (0) target = $region25
    $region24: #{net_forward.1} parent=1 // pred_region
      _
    $region25: #{net_forward.1} parent=1 // pred_fallthru
      _
    // Predicated region
    $region26: #{net_forward.1} parent=1 // pred_check
      _
    $region27: #{net_forward.1} parent=1 // pred_check_branch
      %28 = sbr.rel (0) target = $region29
    $region28: #{net_forward.1} parent=1 // pred_region
      _
    $region29: #{net_forward.1} parent=1 // pred_fallthru
      _
    %v29 = vld [vmem:[%s0] sm:$0xff]
    %v30 = vld [vmem:[%s1] sm:$0xff]
    %v31 = vld [vmem:[%s1 + $0x8] sm:$0x3]
    %v32 = vld [vmem:[%s2] sm:$0xff]
    %v33 = vld [vmem:[%s2 + $0x8] sm:$0x3]
    %35 = vset.pattern.permute.xlu0 0
    %36 = vperm.xlu0 %35, %v32
    %v37 = vpop.permute.xlu0 %36
    %40 = vset.pattern.permute.xlu0 0
    %41 = vperm.xlu0 %40, %v33
    %v42 = vpop.permute.xlu0 %41
    %vm44 = vcmask 162816
    %v46 = vsel %vm44, %v30, 0
    %v49 = vsel %vm44, %v31, 0
    %v52 = vsel %vm44, %v29, 0
    %54 = vmatpush.xpose.msra.mxu0 0.0
    %55 = vmatpush.xpose.msra.mxu0 0.0
    %56 = vmatpush.xpose.msra.mxu0 0.0
    %57 = vmatpush.xpose.msra.mxu0 0.0
    %58 = vmatpush.xpose.msra.mxu0 0.0
    %59 = vmatpush.xpose.msra.mxu0 0.0
    %60 = vmatpush.xpose.msra.mxu0 0.0
    %61 = vmatpush.xpose.msra.mxu0 0.0
    %62 = vmatpush.xpose.msra.mxu0 0.0
    %63 = vmatpush.xpose.msra.mxu0 0.0
    %64 = vmatpush.xpose.msra.mxu0 0.0
    %65 = vmatpush.xpose.msra.mxu0 0.0
    %66 = vmatpush.xpose.msra.mxu0 0.0
    %67 = vmatpush.xpose.msra.mxu0 0.0
    %68 = vmatpush.xpose.msra.mxu0 0.0
    %69 = vmatpush.xpose.msra.mxu0 %v52
    %70 = vmatmul.f32.gmra.mxu0 %v46
    %v71 = vpop.f32.mrf.mxu0
    %v72 = vadd.f32 %v37, %v71
    %73 = vmatmul.f32.gmra.mxu0 %v49
    %v74 = vpop.f32.mrf.mxu0
    %v75 = vadd.f32 %v42, %v74
    %76 = vdwg.mxu0
    %v77 = vmax.f32 %v72, 0.0
    %v78 = vmax.f32 %v75, 0.0
    %v79 = vld [vmem:[%s3] sm:$0xff]
    %v80 = vld [vmem:[%s3 + $0x8] sm:$0x3]
    %v81 = vld [vmem:[%s4] sm:$0xff]
    %v82 = vld [vmem:[%s4 + $0x8] sm:$0x3]
    %84 = vset.pattern.permute.xlu0 0
    %85 = vperm.xlu0 %84, %v81
    %v86 = vpop.permute.xlu0 %85
    %89 = vset.pattern.permute.xlu0 0
    %90 = vperm.xlu0 %89, %v82
    %v91 = vpop.permute.xlu0 %90
    %vm93 = vcmask 80896
    %v95 = vsel %vm93, %v79, 0
    %v98 = vsel %vm93, %v80, 0
    %vm100 = vcmask 1041408
    %v102 = vsel %vm100, %v78, 0
    %104 = vmatpush.msra.mxu0 0.0
    %105 = vmatpush.msra.mxu0 0.0
    %106 = vmatpush.msra.mxu0 0.0
    %107 = vmatpush.msra.mxu0 0.0
    %108 = vmatpush.msra.mxu0 0.0
    %109 = vmatpush.msra.mxu0 0.0
    %110 = vmatpush.msra.mxu0 0.0
    %111 = vmatpush.msra.mxu0 0.0
    %112 = vmatpush.msra.mxu0 0.0
    %113 = vmatpush.msra.mxu0 0.0
    %114 = vmatpush.msra.mxu0 0.0
    %115 = vmatpush.msra.mxu0 0.0
    %116 = vmatpush.msra.mxu0 0.0
    %117 = vmatpush.msra.mxu0 0.0
    %118 = vmatpush.msra.mxu0 %v102
    %119 = vmatpush.msra.mxu0 %v77
    %120 = vmatmul.f32.gmra.mxu0 %v95
    %v121 = vpop.f32.mrf.mxu0
    %v122 = vadd.f32 %v86, %v121
    %123 = vmatmul.f32.gmra.mxu0 %v98
    %v124 = vpop.f32.mrf.mxu0
    %v125 = vadd.f32 %v91, %v124
    %126 = vdwg.mxu0
    %v127 = vmax.f32 %v122, 0.0
    %v128 = vmax.f32 %v125, 0.0
    %v129 = vld [vmem:[%s5] sm:$0xff]
    %v130 = vld [vmem:[%s5 + $0x8] sm:$0x3]
    %132 = vset.pattern.permute.xlu0 0
    %133 = vperm.xlu0 %132, %v129
    %v134 = vpop.permute.xlu0 %133
    %137 = vset.pattern.permute.xlu0 0
    %138 = vperm.xlu0 %137, %v130
    %v139 = vpop.permute.xlu0 %138
    %v141 = vmul.f32 %v134, %v127
    %v142 = vmul.f32 %v139, %v128
    %vm143 = vcmask 64512
    %v144 = vsel %vm143, %v141, 0.0
    %vm145 = vcmask 58368
    %v146 = vsel %vm145, %v142, 0.0
    %v147 = vadd.f32 %v144, %v146
    %v148 = vrot.slane %v147, 4
    %v149 = vadd.f32 %v147, %v148
    %v150 = vrot.slane %v149, 2
    %v151 = vadd.f32 %v149, %v150
    %v152 = vrot.slane %v151, 1
    %v153 = vadd.f32 %v151, %v152
    %v154 = vld [vmem:[#allocation2] sm:$0x1]
    %156 = vset.pattern.permute.xlu0 0
    %157 = vperm.xlu0 %156, %v154
    %v158 = vpop.permute.xlu0 %157
    %v160 = vperm.slane %v158, 0
    %v161 = vadd.f32 %v153, %v160
    %vm162 = vcmask 57344
    %163 = vst.msk [vmem:[#allocation3] sm:$0x1] %vm162, %v161
    // Predicated region
    $region30: #{net_forward.1} parent=1 // pred_check
      _
    $region31: #{net_forward.1} parent=1 // pred_check_branch
      %165 = sbr.rel (0) target = $region33
    $region32: #{net_forward.1} parent=1 // pred_region
      %167 = vsyncadd [#allocation4], 0
      %s169 = sshll.u32 [#allocation3], 4
      %s170 = int_to_ptr.vmem [resolvable:$true] %s169
      %s171 = sshll.u32 %s7, 4
      %s172 = int_to_ptr.hbm [resolvable:$true] %s171
      %174 = dma.vmem_to_hbm [thread:$0]  %s170, 16, %s172, [#allocation4]
    $region33: #{net_forward.1} parent=1 // pred_fallthru
      _
    // Predicated region
    $region34: #{net_forward.1} parent=1 // pred_check
      _
    $region35: #{net_forward.1} parent=1 // pred_check_branch
      %176 = sbr.rel (0) target = $region37
    $region36: #{net_forward.1} parent=1 // pred_region
      %178 = dma.done [#allocation4], 16
    $region37: #{net_forward.1} parent=1 // pred_fallthru
      _
    %179 = vsyncpa [#allocation4], 1

</llo_original>
